<compile_context>
chip_gen: v5e
topology: v5e:2x2
jax: 0.10.0
libtpu: 0.0.40
codegen_flags: <defaults>
</compile_context>

<pallas_src>
import functools

import jax
import jax.numpy as jnp
from jax.experimental import pallas as pl
from jax.experimental.pallas import tpu as pltpu


def embed_kernel(x_ref, w1_ref, b1_ref, w2_ref, b2_ref, o_ref):
    """Fused 2-layer MLP: relu(relu(x@W1 + b1)@W2 + b2) on one row-tile.

    Intermediate activation h is kept in f32 explicitly (no silent downcast if
    narrower weights are ever passed).
    """
    x = x_ref[...]
    # layer 1: Linear + ReLU (MXU matmul, f32 accumulate)
    h = jnp.dot(x, w1_ref[...], preferred_element_type=jnp.float32) + b1_ref[...]
    h = jnp.maximum(h, 0.0)                       # h stays f32
    # layer 2: Linear + ReLU
    y = jnp.dot(h, w2_ref[...], preferred_element_type=jnp.float32) + b2_ref[...]
    o_ref[...] = jnp.maximum(y, 0.0).astype(o_ref.dtype)


def _round_up(v, m):
    return ((v + m - 1) // m) * m


def _block_diag2(w):
    """[[w, 0], [0, w]] for lane-dense 2-row packing."""
    z = jnp.zeros_like(w)
    top = jnp.concatenate([w, z], axis=1)
    bot = jnp.concatenate([z, w], axis=1)
    return jnp.concatenate([top, bot], axis=0)


@functools.partial(jax.jit, static_argnames=("tm",))
def embed_forward(x, w1, b1, w2, b2, *, tm=4096):
    """x: (..., C_in) -> (..., C_out).  Weights w*: (C_in_i, C_out_i), b*: (C_out_i,).

    tm is the slab-row tile (rows of the 2-D array handed to pallas_call,
    i.e. packed rows when lane-dense packing is active).
    """
    orig_shape = x.shape
    c_in, c_hid = w1.shape
    c_out = w2.shape[1]
    x2d = x.reshape(-1, c_in)
    m = x2d.shape[0]
    dtype = x2d.dtype

    # --- lane-dense packing (2 rows per slab row) when it reaches <=128 lanes.
    pack = 2 if (m > 0 and m % 2 == 0
                 and c_in <= 64 and c_hid <= 64 and c_out <= 64) else 1
    if pack == 2:
        xs = x2d.reshape(m // 2, 2 * c_in)          # contiguous reshape, no copy semantics change
        w1k = _block_diag2(w1)                      # (2*c_in, 2*c_hid)
        w2k = _block_diag2(w2)                      # (2*c_hid, 2*c_out)
        b1k = jnp.concatenate([b1, b1]).reshape(1, -1)
        b2k = jnp.concatenate([b2, b2]).reshape(1, -1)
    else:
        xs = x2d
        w1k, w2k = w1, w2
        b1k = b1.reshape(1, -1)
        b2k = b2.reshape(1, -1)

    m_slab = xs.shape[0]
    cin_k = xs.shape[1]
    cout_k = w2k.shape[1]

    # --- row-tile choice.
    #  * large inputs: full tm (amortize per-step overhead, big DMAs)
    #  * mid-size inputs: 2 balanced blocks so v7x megacore uses both TCs
    #  * tiny inputs: single block, rounded up to the 8-row sublane tile
    if m_slab >= 2 * tm:
        tm_eff = tm
    elif m_slab >= 1024:
        tm_eff = _round_up(pl.cdiv(m_slab, 2), 8)
    else:
        tm_eff = max(8, _round_up(m_slab, 8))

    grid = (pl.cdiv(m_slab, tm_eff),)

    itemsize = jnp.dtype(dtype).itemsize
    cost = pl.CostEstimate(
        flops=2 * m * (c_in * c_hid + c_hid * c_out),
        transcendentals=0,
        bytes_accessed=(m * (c_in + c_out)
                        + c_in * c_hid + c_hid
                        + c_hid * c_out + c_out) * itemsize,
    )

    out = pl.pallas_call(
        embed_kernel,
        out_shape=jax.ShapeDtypeStruct((m_slab, cout_k), dtype),
        grid_spec=pltpu.PrefetchScalarGridSpec(
            num_scalar_prefetch=0,
            grid=grid,
            in_specs=[
                pl.BlockSpec((tm_eff, cin_k), lambda i: (i, 0)),   # x row-tile (streamed)
                pl.BlockSpec(w1k.shape, lambda i: (0, 0)),         # W1 (resident)
                pl.BlockSpec(b1k.shape, lambda i: (0, 0)),         # b1 (resident)
                pl.BlockSpec(w2k.shape, lambda i: (0, 0)),         # W2 (resident)
                pl.BlockSpec(b2k.shape, lambda i: (0, 0)),         # b2 (resident)
            ],
            out_specs=pl.BlockSpec((tm_eff, cout_k), lambda i: (i, 0)),
        ),
        compiler_params=pltpu.CompilerParams(
            dimension_semantics=("parallel",)),
        cost_estimate=cost,
    )(xs, w1k, b1k, w2k, b2k)

    return out.reshape(*orig_shape[:-1], c_out)


def init_embed_params(key, feature_dims=(64, 64, 64), dtype=jnp.float32):
    """Deterministic init mimicking nn.Linear default (uniform +/- 1/sqrt(fan_in)).

    Returns list of (W_t, b) with W_t shaped (in, out) (pre-transposed for the kernel).
    """
    params = []
    for fin, fout in zip(feature_dims[:-1], feature_dims[1:]):
        key, kw, kb = jax.random.split(key, 3)
        bound = 1.0 / (fin ** 0.5)
        w_t = jax.random.uniform(kw, (fin, fout), dtype, minval=-bound, maxval=bound)
        b = jax.random.uniform(kb, (fout,), dtype, minval=-bound, maxval=bound)
        params.append((w_t, b))
    return params


def _ref_forward(x, w1, b1, w2, b2):
    h = jnp.maximum(x @ w1 + b1, 0.0)
    return jnp.maximum(h @ w2 + b2, 0.0)


if __name__ == "__main__":
    feature_dims = [64, 64, 64]          # default from the PyTorch module
    key = jax.random.PRNGKey(0)
    k_x, k_x2, k_x3, k_p = jax.random.split(key, 4)

    (w1, b1), (w2, b2) = init_embed_params(k_p, feature_dims)

    # Case 1: small input, even row count -> lane-dense packed path.
    x = jax.random.normal(k_x, (2, 8, feature_dims[0]), dtype=jnp.float32)
    out = jax.block_until_ready(embed_forward(x, w1, b1, w2, b2))
    ref = _ref_forward(x, w1, b1, w2, b2)
    assert out.shape == ref.shape == (2, 8, feature_dims[-1])
    assert jnp.allclose(out, ref, atol=1e-5, rtol=1e-5)

    # Case 2: odd row count (m = 15) -> unpacked path + masked partial block.
    x2 = jax.random.normal(k_x2, (3, 5, feature_dims[0]), dtype=jnp.float32)
    out2 = jax.block_until_ready(embed_forward(x2, w1, b1, w2, b2))
    ref2 = _ref_forward(x2, w1, b1, w2, b2)
    assert out2.shape == ref2.shape == (3, 5, feature_dims[-1])
    assert jnp.allclose(out2, ref2, atol=1e-5, rtol=1e-5)

    # Case 3: mid-size (m = 3000) -> packed, 2 balanced grid steps (v7x split)
    # with a masked partial last block.
    x3 = jax.random.normal(k_x3, (4, 750, feature_dims[0]), dtype=jnp.float32)
    out3 = jax.block_until_ready(embed_forward(x3, w1, b1, w2, b2))
    ref3 = _ref_forward(x3, w1, b1, w2, b2)
    assert out3.shape == ref3.shape == (4, 750, feature_dims[-1])
    assert jnp.allclose(out3, ref3, atol=1e-5, rtol=1e-5)

    print("KERNEL_OK")
</pallas_src>

<mosaic_0001>
module attributes {stable_mosaic.version = 11 : i64} {
  func.func @embed_kernel(%arg0: i32, %arg1: memref<8x128xf32, #tpu.memory_space<vmem>>, %arg2: memref<128x128xf32, #tpu.memory_space<vmem>>, %arg3: memref<1x128xf32, #tpu.memory_space<vmem>>, %arg4: memref<128x128xf32, #tpu.memory_space<vmem>>, %arg5: memref<1x128xf32, #tpu.memory_space<vmem>>, %arg6: memref<8x128xf32, #tpu.memory_space<vmem>>) attributes {dimension_semantics = [#tpu.dimension_semantics<parallel>], iteration_bounds = array<i64: 1>, scalar_prefetch = 0 : i64, scratch_operands = 0 : i64, tpu.core_type = #tpu.core_type<tc>, window_params = [{transform_indices = @transform_0, window_bounds = array<i64: 8, 128>}, {pipeline_mode = #tpu.pipeline_mode<synchronous>, transform_indices = @transform_1, window_bounds = array<i64: 128, 128>}, {pipeline_mode = #tpu.pipeline_mode<synchronous>, transform_indices = @transform_2, window_bounds = array<i64: 1, 128>}, {pipeline_mode = #tpu.pipeline_mode<synchronous>, transform_indices = @transform_3, window_bounds = array<i64: 128, 128>}, {pipeline_mode = #tpu.pipeline_mode<synchronous>, transform_indices = @transform_4, window_bounds = array<i64: 1, 128>}, {transform_indices = @transform_5, window_bounds = array<i64: 8, 128>}]} {
    %c0 = arith.constant 0 : index
    %c0_0 = arith.constant 0 : index
    %0 = vector.load %arg1[%c0, %c0_0] : memref<8x128xf32, #tpu.memory_space<vmem>>, vector<8x128xf32>
    %c0_1 = arith.constant 0 : index
    %c0_2 = arith.constant 0 : index
    %1 = vector.load %arg2[%c0_1, %c0_2] : memref<128x128xf32, #tpu.memory_space<vmem>>, vector<128x128xf32>
    %cst = arith.constant dense<0.000000e+00> : vector<8x128xf32>
    %2 = tpu.matmul %0, %1, %cst {dimension_numbers = #tpu.dot_dimension_numbers<[1], [0], [0], [1], [0, 0, 1, 1], [], []>} : vector<8x128xf32>, vector<128x128xf32>, vector<8x128xf32> -> vector<8x128xf32>
    %c0_3 = arith.constant 0 : index
    %c0_4 = arith.constant 0 : index
    %3 = vector.load %arg3[%c0_3, %c0_4] : memref<1x128xf32, #tpu.memory_space<vmem>>, vector<1x128xf32>
    %4 = vector.broadcast %3 : vector<1x128xf32> to vector<8x128xf32>
    %5 = arith.addf %2, %4 : vector<8x128xf32>
    %cst_5 = arith.constant 0.000000e+00 : f32
    %6 = vector.broadcast %cst_5 : f32 to vector<8x128xf32>
    %7 = arith.maximumf %5, %6 : vector<8x128xf32>
    %c0_6 = arith.constant 0 : index
    %c0_7 = arith.constant 0 : index
    %8 = vector.load %arg4[%c0_6, %c0_7] : memref<128x128xf32, #tpu.memory_space<vmem>>, vector<128x128xf32>
    %cst_8 = arith.constant dense<0.000000e+00> : vector<8x128xf32>
    %9 = tpu.matmul %7, %8, %cst_8 {dimension_numbers = #tpu.dot_dimension_numbers<[1], [0], [0], [1], [0, 0, 1, 1], [], []>} : vector<8x128xf32>, vector<128x128xf32>, vector<8x128xf32> -> vector<8x128xf32>
    %c0_9 = arith.constant 0 : index
    %c0_10 = arith.constant 0 : index
    %10 = vector.load %arg5[%c0_9, %c0_10] : memref<1x128xf32, #tpu.memory_space<vmem>>, vector<1x128xf32>
    %11 = vector.broadcast %10 : vector<1x128xf32> to vector<8x128xf32>
    %12 = arith.addf %9, %11 : vector<8x128xf32>
    %cst_11 = arith.constant 0.000000e+00 : f32
    %13 = vector.broadcast %cst_11 : f32 to vector<8x128xf32>
    %14 = arith.maximumf %12, %13 : vector<8x128xf32>
    %c0_12 = arith.constant 0 : index
    %c0_13 = arith.constant 0 : index
    %15 = vector.load %arg6[%c0_12, %c0_13] : memref<8x128xf32, #tpu.memory_space<vmem>>, vector<8x128xf32>
    tpu.vector_store %arg6[%c0_12, %c0_13], %14 {strides = array<i32>} : memref<8x128xf32, #tpu.memory_space<vmem>>, vector<8x128xf32>,
    return
  }
  func.func @transform_0(%arg0: i32) -> (i32, i32) {
    %c0_i32 = arith.constant 0 : i32
    %c0_i32_0 = arith.constant 0 : i32
    return %arg0, %c0_i32 : i32, i32
  }
  func.func @transform_1(%arg0: i32) -> (i32, i32) {
    %c0_i32 = arith.constant 0 : i32
    %c0_i32_0 = arith.constant 0 : i32
    %c0_i32_1 = arith.constant 0 : i32
    return %c0_i32, %c0_i32_0 : i32, i32
  }
  func.func @transform_2(%arg0: i32) -> (i32, i32) {
    %c0_i32 = arith.constant 0 : i32
    %c0_i32_0 = arith.constant 0 : i32
    %c0_i32_1 = arith.constant 0 : i32
    return %c0_i32, %c0_i32_0 : i32, i32
  }
  func.func @transform_3(%arg0: i32) -> (i32, i32) {
    %c0_i32 = arith.constant 0 : i32
    %c0_i32_0 = arith.constant 0 : i32
    %c0_i32_1 = arith.constant 0 : i32
    return %c0_i32, %c0_i32_0 : i32, i32
  }
  func.func @transform_4(%arg0: i32) -> (i32, i32) {
    %c0_i32 = arith.constant 0 : i32
    %c0_i32_0 = arith.constant 0 : i32
    %c0_i32_1 = arith.constant 0 : i32
    return %c0_i32, %c0_i32_0 : i32, i32
  }
  func.func @transform_5(%arg0: i32) -> (i32, i32) {
    %c0_i32 = arith.constant 0 : i32
    %c0_i32_0 = arith.constant 0 : i32
    return %arg0, %c0_i32 : i32, i32
  }
}

</mosaic_0001>

<llo_original>
// kernel: embed_forward.1
$region0: #{embed_forward.1}
  #allocation0 [shape = 'u32[]', space=smem, size = 0x4, offset = 0x4, fixed_abs, tag = 'smem constant byte address 0x4 - core index']
  #allocation1 [shape = 'u32[72,128]{1,0:T(1,128)}', space=vmem, size = 0x9000, scoped, tag = 'internal scratch']
  %s0 = inlined_call_operand.vmem [shape: f32[8,128], index: 0, kind: input, shape index: {}]
  %s1 = inlined_call_operand.vmem [shape: f32[128,128], index: 1, kind: input, shape index: {}]
  %s2 = inlined_call_operand.vmem [shape: f32[1,128], index: 2, kind: input, shape index: {}]
  %s3 = inlined_call_operand.vmem [shape: f32[128,128], index: 3, kind: input, shape index: {}]
  %s4 = inlined_call_operand.vmem [shape: f32[1,128], index: 4, kind: input, shape index: {}]
  %s5 = inlined_call_operand.vmem [shape: f32[8,128], index: 5, kind: output, shape index: {}]
  %s6 = sld [smem:[#allocation0]]
  $region30: #{embed_forward.1} parent=0
    _
  %s8 = ssub.s32 1, %s6
  %s9 = scalar_select 0, %s8, %s6
  // Predicated region
  $region2: #{embed_forward.1} parent=0 // pred_check
    _
  $region3: #{embed_forward.1} parent=0 // pred_check_branch
    %11 = sbr.rel (0) target = $region5
  $region4: #{embed_forward.1} parent=0 // pred_region
    _
  $region5: #{embed_forward.1} parent=0 // pred_fallthru
    _
  // Predicated region
  $region6: #{embed_forward.1} parent=0 // pred_check
    _
  $region7: #{embed_forward.1} parent=0 // pred_check_branch
    %13 = sbr.rel (0) target = $region9
  $region8: #{embed_forward.1} parent=0 // pred_region
    _
  $region9: #{embed_forward.1} parent=0 // pred_fallthru
    _
  // Predicated region
  $region10: #{embed_forward.1} parent=0 // pred_check
    _
  $region11: #{embed_forward.1} parent=0 // pred_check_branch
    %15 = sbr.rel (0) target = $region13
  $region12: #{embed_forward.1} parent=0 // pred_region
    _
  $region13: #{embed_forward.1} parent=0 // pred_fallthru
    _
  // Predicated region
  $region14: #{embed_forward.1} parent=0 // pred_check
    _
  $region15: #{embed_forward.1} parent=0 // pred_check_branch
    %17 = sbr.rel (0) target = $region17
  $region16: #{embed_forward.1} parent=0 // pred_region
    _
  $region17: #{embed_forward.1} parent=0 // pred_fallthru
    _
  // Predicated region
  $region18: #{embed_forward.1} parent=0 // pred_check
    _
  $region19: #{embed_forward.1} parent=0 // pred_check_branch
    %19 = sbr.rel (0) target = $region21
  $region20: #{embed_forward.1} parent=0 // pred_region
    _
  $region21: #{embed_forward.1} parent=0 // pred_fallthru
    _
  %v20 = vld [vmem:[%s0] sm:$0xff]
  %v21 = vld [vmem:[%s1] sm:$0xff]
  %v22 = vld [vmem:[%s1 + $0x8] sm:$0xff]
  %v23 = vld [vmem:[%s1 + $0x10] sm:$0xff]
  %v24 = vld [vmem:[%s1 + $0x18] sm:$0xff]
  %v25 = vld [vmem:[%s1 + $0x20] sm:$0xff]
  %v26 = vld [vmem:[%s1 + $0x28] sm:$0xff]
  %v27 = vld [vmem:[%s1 + $0x30] sm:$0xff]
  %v28 = vld [vmem:[%s1 + $0x38] sm:$0xff]
  %v29 = vld [vmem:[%s1 + $0x40] sm:$0xff]
  %v30 = vld [vmem:[%s1 + $0x48] sm:$0xff]
  %v31 = vld [vmem:[%s1 + $0x50] sm:$0xff]
  %v32 = vld [vmem:[%s1 + $0x58] sm:$0xff]
  %v33 = vld [vmem:[%s1 + $0x60] sm:$0xff]
  %v34 = vld [vmem:[%s1 + $0x68] sm:$0xff]
  %v35 = vld [vmem:[%s1 + $0x70] sm:$0xff]
  %v36 = vld [vmem:[%s1 + $0x78] sm:$0xff]
  %v37 = vld [vmem:[%s2] sm:$0x1]
  %v39 = vperm.slane %v37, 0
  %41 = vmatpush.msra.mxu0 %v36
  %42 = vmatpush.msra.mxu0 %v35
  %43 = vmatpush.msra.mxu0 %v34
  %44 = vmatpush.msra.mxu0 %v33
  %45 = vmatpush.msra.mxu0 %v32
  %46 = vmatpush.msra.mxu0 %v31
  %47 = vmatpush.msra.mxu0 %v30
  %48 = vmatpush.msra.mxu0 %v29
  %49 = vmatpush.msra.mxu0 %v28
  %50 = vmatpush.msra.mxu0 %v27
  %51 = vmatpush.msra.mxu0 %v26
  %52 = vmatpush.msra.mxu0 %v25
  %53 = vmatpush.msra.mxu0 %v24
  %54 = vmatpush.msra.mxu0 %v23
  %55 = vmatpush.msra.mxu0 %v22
  %56 = vmatpush.msra.mxu0 %v21
  %57 = vmatmul.f32.gmra.mxu0 %v20
  %v58 = vpop.f32.mrf.mxu0
  %v59 = vadd.f32 %v39, %v58
  %60 = vdwg.mxu0
  %v61 = vmax.f32 %v59, 0.0
  %v62 = vld [vmem:[%s3] sm:$0xff]
  %v63 = vld [vmem:[%s3 + $0x8] sm:$0xff]
  %v64 = vld [vmem:[%s3 + $0x10] sm:$0xff]
  %v65 = vld [vmem:[%s3 + $0x18] sm:$0xff]
  %v66 = vld [vmem:[%s3 + $0x20] sm:$0xff]
  %v67 = vld [vmem:[%s3 + $0x28] sm:$0xff]
  %v68 = vld [vmem:[%s3 + $0x30] sm:$0xff]
  %v69 = vld [vmem:[%s3 + $0x38] sm:$0xff]
  %v70 = vld [vmem:[%s3 + $0x40] sm:$0xff]
  %v71 = vld [vmem:[%s3 + $0x48] sm:$0xff]
  %v72 = vld [vmem:[%s3 + $0x50] sm:$0xff]
  %v73 = vld [vmem:[%s3 + $0x58] sm:$0xff]
  %v74 = vld [vmem:[%s3 + $0x60] sm:$0xff]
  %v75 = vld [vmem:[%s3 + $0x68] sm:$0xff]
  %v76 = vld [vmem:[%s3 + $0x70] sm:$0xff]
  %v77 = vld [vmem:[%s3 + $0x78] sm:$0xff]
  %v78 = vld [vmem:[%s4] sm:$0x1]
  %v80 = vperm.slane %v78, 0
  %82 = vmatpush.msra.mxu0 %v77
  %83 = vmatpush.msra.mxu0 %v76
  %84 = vmatpush.msra.mxu0 %v75
  %85 = vmatpush.msra.mxu0 %v74
  %86 = vmatpush.msra.mxu0 %v73
  %87 = vmatpush.msra.mxu0 %v72
  %88 = vmatpush.msra.mxu0 %v71
  %89 = vmatpush.msra.mxu0 %v70
  %90 = vmatpush.msra.mxu0 %v69
  %91 = vmatpush.msra.mxu0 %v68
  %92 = vmatpush.msra.mxu0 %v67
  %93 = vmatpush.msra.mxu0 %v66
  %94 = vmatpush.msra.mxu0 %v65
  %95 = vmatpush.msra.mxu0 %v64
  %96 = vmatpush.msra.mxu0 %v63
  %97 = vmatpush.msra.mxu0 %v62
  %98 = vmatmul.f32.gmra.mxu0 %v61
  %v99 = vpop.f32.mrf.mxu0
  %v100 = vadd.f32 %v80, %v99
  %101 = vdwg.mxu0
  %v102 = vmax.f32 %v100, 0.0
  %103 = vst [vmem:[%s5] sm:$0xff] %v102
  // Predicated region
  $region22: #{embed_forward.1} parent=0 // pred_check
    _
  $region23: #{embed_forward.1} parent=0 // pred_check_branch
    %105 = sbr.rel (0) target = $region25
  $region24: #{embed_forward.1} parent=0 // pred_region
    _
  $region25: #{embed_forward.1} parent=0 // pred_fallthru
    _
  // Predicated region
  $region26: #{embed_forward.1} parent=0 // pred_check
    _
  $region27: #{embed_forward.1} parent=0 // pred_check_branch
    %107 = sbr.rel (0) target = $region29
  $region28: #{embed_forward.1} parent=0 // pred_region
    _
  $region29: #{embed_forward.1} parent=0 // pred_fallthru
    _

</llo_original>
